<compile_context>
chip_gen: v5e
topology: v5e:2x2
jax: 0.10.0
libtpu: 0.0.40
codegen_flags: <defaults>
</compile_context>

<pallas_src>
import numpy as np
import jax
import jax.numpy as jnp
from jax.experimental import pallas as pl
from jax.experimental.pallas import tpu as pltpu


def _normalize_padding(ndim, padding):
    """PyTorch F.pad padding tuple -> per-dim ((lo, hi), ...) for all ndim dims."""
    assert len(padding) % 2 == 0, "F.pad padding must have even length"
    k = len(padding) // 2
    assert k <= ndim, "padding refers to more dims than the input has"
    pads = [(0, 0)] * ndim
    for i in range(k):
        lo, hi = int(padding[2 * i]), int(padding[2 * i + 1])
        pads[ndim - 1 - i] = (lo, hi)
    return tuple(pads)


def _make_pad_kernel(in_block, out_block, block_pads, value, dtype):
    """Kernel writing constant slabs + one interior copy into the output block."""
    nblk = len(out_block)
    crop_lo = tuple(max(-lo, 0) for lo, _ in block_pads)
    crop_hi = tuple(max(-hi, 0) for _, hi in block_pads)
    copy_ext = tuple(s - cl - ch for s, cl, ch in zip(in_block, crop_lo, crop_hi))
    dst_lo = tuple(max(lo, 0) for lo, _ in block_pads)
    do_copy = all(e > 0 for e in copy_ext)

    def pad_kernel(x_ref, o_ref):
        # Constant border slabs.  Each slab spans the full extent of every other
        # dim; corners shared by two slabs get the same value twice (harmless).
        for d, (lo, hi) in enumerate(block_pads):
            if lo > 0:
                idx = tuple(slice(0, lo) if i == d else slice(None)
                            for i in range(nblk))
                shp = tuple(lo if i == d else out_block[i] for i in range(nblk))
                o_ref[idx] = jnp.full(shp, value, dtype)
            if hi > 0:
                idx = tuple(slice(out_block[d] - hi, out_block[d]) if i == d
                            else slice(None) for i in range(nblk))
                shp = tuple(hi if i == d else out_block[i] for i in range(nblk))
                o_ref[idx] = jnp.full(shp, value, dtype)
        # Interior copy (handles cropping via static source offsets).
        if do_copy:
            src = tuple(slice(cl, cl + e) for cl, e in zip(crop_lo, copy_ext))
            dst = tuple(slice(dl, dl + e) for dl, e in zip(dst_lo, copy_ext))
            o_ref[dst] = x_ref[src]

    return pad_kernel


def _pick_batch_block(B, row_bytes, budget=8 * 1024 * 1024):
    """Largest divisor of B within the VMEM budget that still leaves >= 2 grid steps."""
    max_bb = max(1, budget // max(row_bytes, 1))
    upper = max(1, min(max_bb, B // 2) if B >= 2 else 1)
    for d in range(upper, 0, -1):
        if B % d == 0:
            return d
    return 1


def pallas_pad(x, padding, value=0.0):
    """Constant pad of `x` with PyTorch F.pad semantics, as one Pallas kernel."""
    ndim = x.ndim
    pads = _normalize_padding(ndim, padding)
    out_shape = tuple(s + lo + hi for s, (lo, hi) in zip(x.shape, pads))
    assert all(s > 0 for s in out_shape), "padding crops a dimension to size <= 0"
    dtype = x.dtype

    # Fast path: >=3D input whose leading (pre-trailing-two) dims are un-padded.
    # Collapse those dims into a single "parallel" grid axis.
    lead = ndim - 2
    if ndim >= 3 and all(pads[d] == (0, 0) for d in range(lead)):
        B = int(np.prod(x.shape[:lead]))
        tail_in = tuple(x.shape[lead:])
        tail_out = tuple(out_shape[lead:])
        tail_pads = pads[lead:]

        itemsize = jnp.dtype(dtype).itemsize
        row_bytes = (int(np.prod(tail_in)) + int(np.prod(tail_out))) * itemsize
        bb = _pick_batch_block(B, row_bytes)

        in_block = (bb,) + tail_in
        out_block = (bb,) + tail_out
        block_pads = ((0, 0),) + tail_pads
        kernel = _make_pad_kernel(in_block, out_block, block_pads, value, dtype)

        x3 = x.reshape((B,) + tail_in)  # leading-dim collapse: layout-free
        out3 = pl.pallas_call(
            kernel,
            out_shape=jax.ShapeDtypeStruct((B,) + tail_out, dtype),
            grid=(B // bb,),
            in_specs=[pl.BlockSpec(in_block, lambda b: (b, 0, 0))],
            out_specs=pl.BlockSpec(out_block, lambda b: (b, 0, 0)),
            compiler_params=pltpu.CompilerParams(
                dimension_semantics=("parallel",)),
        )(x3)
        return out3.reshape(out_shape)

    # Fallback: single full-array block (covers <3D inputs and padding that
    # touches the leading dims).
    # TODO(synk): very large arrays needing padding on leading dims would want
    # an additional spatial tiling pass; not needed for this module's usage.
    kernel = _make_pad_kernel(x.shape, out_shape, pads, value, dtype)
    return pl.pallas_call(
        kernel,
        out_shape=jax.ShapeDtypeStruct(out_shape, dtype),
    )(x)


if __name__ == "__main__":
    key = jax.random.PRNGKey(0)
    k1, k2, k3 = jax.random.split(key, 3)

    # Case 1: pad the last two dims of an NCHW fmap with a non-zero value.
    # PyTorch order: (w_left, w_right, h_top, h_bottom).
    x1 = jax.random.normal(k1, (2, 4, 16, 16), jnp.float32)
    out1 = jax.block_until_ready(pallas_pad(x1, (1, 1, 2, 0), 1.5))
    assert out1.shape == (2, 4, 18, 18)
    ref1 = jnp.pad(x1, ((0, 0), (0, 0), (2, 0), (1, 1)), constant_values=1.5)
    np.testing.assert_array_equal(np.asarray(out1), np.asarray(ref1))

    # Case 2: pad only the last dim with the module's default value (0.0).
    x2 = jax.random.normal(k2, (2, 4, 16, 16), jnp.float32)
    out2 = jax.block_until_ready(pallas_pad(x2, (0, 3)))
    assert out2.shape == (2, 4, 16, 19)
    ref2 = jnp.pad(x2, ((0, 0), (0, 0), (0, 0), (0, 3)), constant_values=0.0)
    np.testing.assert_array_equal(np.asarray(out2), np.asarray(ref2))

    # Case 3: negative (cropping) padding mixed with positive padding.
    # padding=(-2, 3, 1, -1): crop 2 from W-left, add 3 at W-right,
    # add 1 at H-top, crop 1 from H-bottom.
    x3 = jax.random.normal(k3, (2, 4, 16, 16), jnp.float32)
    out3 = jax.block_until_ready(pallas_pad(x3, (-2, 3, 1, -1), 0.5))
    assert out3.shape == (2, 4, 16, 17)
    ref3 = jnp.pad(x3[:, :, :15, 2:], ((0, 0), (0, 0), (1, 0), (0, 3)),
                   constant_values=0.5)
    np.testing.assert_array_equal(np.asarray(out3), np.asarray(ref3))

    print("KERNEL_OK")
</pallas_src>

<mosaic_0001>
module attributes {stable_mosaic.version = 11 : i64} {
  func.func @pad_kernel(%arg0: i32, %arg1: memref<4x16x16xf32, #tpu.memory_space<vmem>>, %arg2: memref<4x18x18xf32, #tpu.memory_space<vmem>>) attributes {dimension_semantics = [#tpu.dimension_semantics<parallel>], iteration_bounds = array<i64: 2>, scalar_prefetch = 0 : i64, scratch_operands = 0 : i64, tpu.core_type = #tpu.core_type<tc>, window_params = [{transform_indices = @transform_0, window_bounds = array<i64: 4, 16, 16>}, {transform_indices = @transform_1, window_bounds = array<i64: 4, 18, 18>}]} {
    %cst = arith.constant 1.500000e+00 : f32
    %0 = vector.broadcast %cst : f32 to vector<4x2x18xf32>
    %c0 = arith.constant 0 : index
    %c0_0 = arith.constant 0 : index
    %c0_1 = arith.constant 0 : index
    %1 = vector.load %arg2[%c0, %c0_0, %c0_1] : memref<4x18x18xf32, #tpu.memory_space<vmem>>, vector<4x2x18xf32>
    tpu.vector_store %arg2[%c0, %c0_0, %c0_1], %0 {strides = array<i32>} : memref<4x18x18xf32, #tpu.memory_space<vmem>>, vector<4x2x18xf32>,
    %cst_2 = arith.constant 1.500000e+00 : f32
    %2 = vector.broadcast %cst_2 : f32 to vector<4x18x1xf32>
    %c0_3 = arith.constant 0 : index
    %c0_4 = arith.constant 0 : index
    %c0_5 = arith.constant 0 : index
    %3 = vector.load %arg2[%c0_3, %c0_4, %c0_5] : memref<4x18x18xf32, #tpu.memory_space<vmem>>, vector<4x18x1xf32>
    tpu.vector_store %arg2[%c0_3, %c0_4, %c0_5], %2 {strides = array<i32>} : memref<4x18x18xf32, #tpu.memory_space<vmem>>, vector<4x18x1xf32>,
    %cst_6 = arith.constant 1.500000e+00 : f32
    %4 = vector.broadcast %cst_6 : f32 to vector<4x18x1xf32>
    %c0_7 = arith.constant 0 : index
    %c0_8 = arith.constant 0 : index
    %c17 = arith.constant 17 : index
    %5 = vector.load %arg2[%c0_7, %c0_8, %c17] : memref<4x18x18xf32, #tpu.memory_space<vmem>>, vector<4x18x1xf32>
    tpu.vector_store %arg2[%c0_7, %c0_8, %c17], %4 {strides = array<i32>} : memref<4x18x18xf32, #tpu.memory_space<vmem>>, vector<4x18x1xf32>,
    %c0_9 = arith.constant 0 : index
    %c0_10 = arith.constant 0 : index
    %c0_11 = arith.constant 0 : index
    %6 = vector.load %arg1[%c0_9, %c0_10, %c0_11] : memref<4x16x16xf32, #tpu.memory_space<vmem>>, vector<4x16x16xf32>
    %c0_12 = arith.constant 0 : index
    %c2 = arith.constant 2 : index
    %c1 = arith.constant 1 : index
    %7 = vector.load %arg2[%c0_12, %c2, %c1] : memref<4x18x18xf32, #tpu.memory_space<vmem>>, vector<4x16x16xf32>
    tpu.vector_store %arg2[%c0_12, %c2, %c1], %6 {strides = array<i32>} : memref<4x18x18xf32, #tpu.memory_space<vmem>>, vector<4x16x16xf32>,
    return
  }
  func.func @transform_0(%arg0: i32) -> (i32, i32, i32) {
    %c0_i32 = arith.constant 0 : i32
    %c0_i32_0 = arith.constant 0 : i32
    %c0_i32_1 = arith.constant 0 : i32
    return %arg0, %c0_i32, %c0_i32_0 : i32, i32, i32
  }
  func.func @transform_1(%arg0: i32) -> (i32, i32, i32) {
    %c0_i32 = arith.constant 0 : i32
    %c0_i32_0 = arith.constant 0 : i32
    %c0_i32_1 = arith.constant 0 : i32
    return %arg0, %c0_i32, %c0_i32_0 : i32, i32, i32
  }
}

</mosaic_0001>

<llo_original>
// kernel: tpu_custom_call.1
$region0: #{tpu_custom_call.1}
  #allocation0 [shape = 'u32[]', space=smem, size = 0x4, offset = 0x4, fixed_abs, tag = 'smem constant byte address 0x4 - core index']
  #allocation1 [shape = 'u32[72,128]{1,0:T(1,128)}', space=vmem, size = 0x9000, scoped, tag = 'internal scratch']
  %s0 = inlined_call_operand.hbm [shape: f32[8,16,16], index: 0, kind: input, shape index: {}]
  %s1 = inlined_call_operand.vmem [shape: f32[8,18,18], index: 1, kind: output, shape index: {}]
  %s2 = sld [smem:[#allocation0]]
  $region41: #{tpu_custom_call.1} parent=0
    _
  %s4 = ssub.s32 1, %s2
  %s5 = scalar_select 0, %s4, %s2
  $region1: #{tpu_custom_call.1} parent=0
    #allocation2 [shape = 'u8[65536]{0}', space=vmem, size = 0x10000, scoped, tag = 'input window, operand 0']
    #allocation3 [shape = 's32[2]{0}', space=sflag, size = 0x8, scoped, tag = 'scoped memory for tpu_custom_call.1']
    %6 = vsyncpa [#allocation3], 0
    %s7 = scalar_lea.sflag [#allocation3], 1
    %8 = vsyncpa %s7, 0
    loop: start=0, step=1, limit=4
    $region2: #{tpu_custom_call.1} parent=1 // loop_pre_header
      _
    $region3: #{tpu_custom_call.1} parent=1 // loop_header
      %s10 = sphi 0, %s14
      %p11 = scmp.ge.s32.totalorder %s10, 4
      %s20 = sphi 0, %s22
      %s23 = sphi 0, %s20
      %s24 = sphi 0, %s23
      %s40 = sphi 0, %s24
      %s46 = sphi 0, %s48
      %s49 = sphi 0, %s46
      %s50 = sphi 0, %s49
      %s66 = sphi 0, %s50
    $region4: #{tpu_custom_call.1} parent=1 // loop_header_branch
      %13 = sbr.rel (%p11) target = $region8
    $region5: #{tpu_custom_call.1} parent=1 // loop_body
      %s15 = ssub.s32 %s10, 1
      %s16 = ssub.s32 %s10, 2
      %s17 = sadd.s32 %s10, 1
      %s18 = ssub.s32 %s10, %s17
      %p19 = scmp.eq.s32.totalorder %s18, 0
      %s21 = sadd.s32 %s20, 1
      %s22 = scalar_select %p19, %s20, %s21
      %p25 = pneg %p19
      %p26 = scmp.eq.s32.totalorder %s10, 1
      %p27 = por %p25, %p26
      %p28 = scmp.ne.s32.totalorder %s20, %s23
      %p29 = scmp.eq.s32.totalorder %s10, 0
      %p30 = por %p28, %p29
      %p31 = scmp.ne.s32.totalorder %s20, %s23
      %p32 = scmp.eq.s32.totalorder %s15, 1
      %p33 = por %p31, %p32
      %p34 = scmp.ne.s32.totalorder %s23, %s24
      %p35 = scmp.eq.s32.totalorder %s15, 0
      %p36 = por %p34, %p35
      %p37 = scmp.ne.s32.totalorder %s23, %s24
      %p38 = scmp.eq.s32.totalorder %s16, 1
      %p39 = por %p37, %p38
      %p41 = scmp.ne.s32.totalorder %s24, %s40
      %p42 = scmp.eq.s32.totalorder %s16, 0
      %p43 = por %p41, %p42
      %s44 = ssub.s32 %s10, %s17
      %p45 = scmp.eq.s32.totalorder %s44, 0
      %s47 = sadd.s32 %s46, 1
      %s48 = scalar_select %p45, %s46, %s47
      %p51 = pneg %p45
      %p52 = scmp.eq.s32.totalorder %s10, 1
      %p53 = por %p51, %p52
      %p54 = scmp.ne.s32.totalorder %s46, %s49
      %p55 = scmp.eq.s32.totalorder %s10, 0
      %p56 = por %p54, %p55
      %p57 = scmp.ne.s32.totalorder %s46, %s49
      %p58 = scmp.eq.s32.totalorder %s15, 1
      %p59 = por %p57, %p58
      %p60 = scmp.ne.s32.totalorder %s49, %s50
      %p61 = scmp.eq.s32.totalorder %s15, 0
      %p62 = por %p60, %p61
      %p63 = scmp.ne.s32.totalorder %s49, %s50
      %p64 = scmp.eq.s32.totalorder %s16, 1
      %p65 = por %p63, %p64
      %p67 = scmp.ne.s32.totalorder %s50, %s66
      %p68 = scmp.eq.s32.totalorder %s16, 0
      %p69 = por %p67, %p68
      %p70 = scmp.le.s32.totalorder 1, %s10
      %p71 = scmp.lt.s32.totalorder %s10, 3
      %p72 = pnand %p70, %p71
      %p73 = pneg %p72
      // Predicated region
      $region9: #{tpu_custom_call.1} parent=5 // pred_check
        _
      $region10: #{tpu_custom_call.1} parent=5 // pred_check_branch
        %75 = sbr.rel (%p72) target = $region12
      $region11: #{tpu_custom_call.1} parent=5 // pred_region
        %s76 = ssub.s32 %s10, 1
      $region12: #{tpu_custom_call.1} parent=5 // pred_fallthru
        _
      %p77 = scmp.lt.s32.totalorder %s10, 2
      // Predicated region
      $region13: #{tpu_custom_call.1} parent=5 // pred_check
        %p78 = pneg %p77
      $region14: #{tpu_custom_call.1} parent=5 // pred_check_branch
        %80 = sbr.rel (%p78) target = $region16
      $region15: #{tpu_custom_call.1} parent=5 // pred_region
        // Predicated region
        $region17: #{tpu_custom_call.1} parent=15 // pred_check
          %p81 = pneg %p30
        $region18: #{tpu_custom_call.1} parent=15 // pred_check_branch
          %83 = sbr.rel (%p81) target = $region20
        $region19: #{tpu_custom_call.1} parent=15 // pred_region
          %s84 = sand.u32 %s20, 1
          %s85 = scalar_lea.sflag [#allocation3], %s84
          %s86 = sand.u32 %s20, 1
          %s87 = smul.addr %s86, 64
          %s88 = scalar_lea.vmem [#allocation2], %s87
          %s89 = smul.u32 4, %s10
          %91 = vsyncadd %s85, 0
          %s92 = smul.addr %s89, 2
          %s93 = smul.addr %s92, 8
          %s94 = scalar_lea.hbm %s0, %s93
          %s95 = sshll.u32 %s94, 4
          %s96 = int_to_ptr.hbm [resolvable:$true] %s95
          %s97 = sshll.u32 %s88, 4
          %s98 = int_to_ptr.vmem [resolvable:$true] %s97
          %103 = dma.hbm_to_vmem [thread:$0]  %s96, 1024, %s98, %s85, 128, 128, 8
        $region20: #{tpu_custom_call.1} parent=15 // pred_fallthru
          _
      $region16: #{tpu_custom_call.1} parent=5 // pred_fallthru
        _
      %p104 = scmp.le.s32.totalorder 1, %s10
      %p105 = scmp.lt.s32.totalorder %s10, 3
      %p106 = pnand %p104, %p105
      %p107 = pneg %p106
      // Predicated region
      $region21: #{tpu_custom_call.1} parent=5 // pred_check
        _
      $region22: #{tpu_custom_call.1} parent=5 // pred_check_branch
        %109 = sbr.rel (%p106) target = $region24
      $region23: #{tpu_custom_call.1} parent=5 // pred_region
        %s110 = ssub.s32 %s10, 1
        %s111 = sand.u32 %s23, 1
        %s112 = scalar_lea.sflag [#allocation3], %s111
        %s113 = sand.u32 %s23, 1
        %s114 = smul.addr %s113, 64
        %s115 = scalar_lea.vmem [#allocation2], %s114
        // Predicated region
        $region25: #{tpu_custom_call.1} parent=23 // pred_check
          %p116 = pneg %p36
        $region26: #{tpu_custom_call.1} parent=23 // pred_check_branch
          %118 = sbr.rel (%p116) target = $region28
        $region27: #{tpu_custom_call.1} parent=23 // pred_region
          %120 = dma.done %s112, 1024
        $region28: #{tpu_custom_call.1} parent=23 // pred_fallthru
          _
        %s121 = sand.u32 %s23, 1
        %s122 = scalar_lea.sflag [#allocation3], %s121
        %s123 = sand.u32 %s23, 1
        %s124 = smul.addr %s123, 64
        %s125 = scalar_lea.vmem [#allocation2], %s124
        %p126 = pneg %p36
        %p127 = pneg %p33
        %p128 = pneg %p62
        %p129 = pneg %p59
        %s130 = smul.u32 4, %s15
        %p131 = scmp.lt.s32.totalorder %s130, 7
        %s132 = scalar_select %p131, %s130, 7
        %s133 = smul.addr %s132, 3
        %s134 = smul.addr %s133, 8
        %s135 = scalar_lea.vmem %s1, %s134
        %s136 = smul.u32 4, %s15
        %s137 = smul.u32 4, %s15
        %p138 = scmp.lt.s32.totalorder %s137, 7
        %s139 = scalar_select %p138, %s137, 7
        %s140 = smul.addr %s139, 3
        %s141 = smul.addr %s140, 8
        %s142 = scalar_lea.vmem %s1, %s141
        %s143 = smul.u32 4, %s15
        %vm144 = vcmask 140288
        %145 = vst.msk [vmem:[%s142] sm:$0x3] %vm144, 1.5
        %146 = vst.msk [vmem:[%s142 + $0x18] sm:$0x3] %vm144, 1.5
        %147 = vst.msk [vmem:[%s142 + $0x30] sm:$0x3] %vm144, 1.5
        %148 = vst.msk [vmem:[%s142 + $0x48] sm:$0x3] %vm144, 1.5
        %vm149 = vcmask 7168
        %150 = vst.msk [vmem:[%s142] sm:$0xff] %vm149, 1.5
        %151 = vst.msk [vmem:[%s142 + $0x8] sm:$0xff] %vm149, 1.5
        %vm152 = vcmask 1024
        %153 = vst.msk [vmem:[%s142 + $0x10] sm:$0x3] %vm152, 1.5
        %154 = vst.msk [vmem:[%s142 + $0x18] sm:$0xff] %vm149, 1.5
        %155 = vst.msk [vmem:[%s142 + $0x20] sm:$0xff] %vm149, 1.5
        %156 = vst.msk [vmem:[%s142 + $0x28] sm:$0x3] %vm152, 1.5
        %157 = vst.msk [vmem:[%s142 + $0x30] sm:$0xff] %vm149, 1.5
        %158 = vst.msk [vmem:[%s142 + $0x38] sm:$0xff] %vm149, 1.5
        %159 = vst.msk [vmem:[%s142 + $0x40] sm:$0x3] %vm152, 1.5
        %160 = vst.msk [vmem:[%s142 + $0x48] sm:$0xff] %vm149, 1.5
        %161 = vst.msk [vmem:[%s142 + $0x50] sm:$0xff] %vm149, 1.5
        %162 = vst.msk [vmem:[%s142 + $0x58] sm:$0x3] %vm152, 1.5
        %vm163 = vcmask 146568
        %164 = vst.msk [vmem:[%s142] sm:$0xff] %vm163, 1.5
        %165 = vst.msk [vmem:[%s142 + $0x8] sm:$0xff] %vm163, 1.5
        %vm166 = vcmask 140424
        %167 = vst.msk [vmem:[%s142 + $0x10] sm:$0x3] %vm166, 1.5
        %168 = vst.msk [vmem:[%s142 + $0x18] sm:$0xff] %vm163, 1.5
        %169 = vst.msk [vmem:[%s142 + $0x20] sm:$0xff] %vm163, 1.5
        %170 = vst.msk [vmem:[%s142 + $0x28] sm:$0x3] %vm166, 1.5
        %171 = vst.msk [vmem:[%s142 + $0x30] sm:$0xff] %vm163, 1.5
        %172 = vst.msk [vmem:[%s142 + $0x38] sm:$0xff] %vm163, 1.5
        %173 = vst.msk [vmem:[%s142 + $0x40] sm:$0x3] %vm166, 1.5
        %174 = vst.msk [vmem:[%s142 + $0x48] sm:$0xff] %vm163, 1.5
        %175 = vst.msk [vmem:[%s142 + $0x50] sm:$0xff] %vm163, 1.5
        %176 = vst.msk [vmem:[%s142 + $0x58] sm:$0x3] %vm166, 1.5
        %v177 = vld [vmem:[%s115] sm:$0xff]
        %v178 = vld [vmem:[%s115 + $0x8] sm:$0xff]
        %v179 = vld [vmem:[%s115 + $0x10] sm:$0xff]
        %v180 = vld [vmem:[%s115 + $0x18] sm:$0xff]
        %v181 = vld [vmem:[%s115 + $0x20] sm:$0xff]
        %v182 = vld [vmem:[%s115 + $0x28] sm:$0xff]
        %v183 = vld [vmem:[%s115 + $0x30] sm:$0xff]
        %v184 = vld [vmem:[%s115 + $0x38] sm:$0xff]
        %193 = vrot.lane.b32.xlu0 %v177, 1
        %v194 = vpop.permute.xlu0 %193
        %195 = vrot.lane.b32.xlu0 %v178, 1
        %v196 = vpop.permute.xlu0 %195
        %197 = vrot.lane.b32.xlu0 %v179, 1
        %v198 = vpop.permute.xlu0 %197
        %199 = vrot.lane.b32.xlu0 %v180, 1
        %v200 = vpop.permute.xlu0 %199
        %201 = vrot.lane.b32.xlu0 %v181, 1
        %v202 = vpop.permute.xlu0 %201
        %203 = vrot.lane.b32.xlu0 %v182, 1
        %v204 = vpop.permute.xlu0 %203
        %205 = vrot.lane.b32.xlu0 %v183, 1
        %v206 = vpop.permute.xlu0 %205
        %207 = vrot.lane.b32.xlu0 %v184, 1
        %v208 = vpop.permute.xlu0 %207
        %vm217 = vcmask 138248
        %218 = vst.msk [vmem:[%s142 + $0x2] sm:$0xff] %vm217, %v194
        %219 = vst.msk [vmem:[%s142 + $0xa] sm:$0xff] %vm217, %v196
        %220 = vst.msk [vmem:[%s142 + $0x1a] sm:$0xff] %vm217, %v198
        %221 = vst.msk [vmem:[%s142 + $0x22] sm:$0xff] %vm217, %v200
        %222 = vst.msk [vmem:[%s142 + $0x32] sm:$0xff] %vm217, %v202
        %223 = vst.msk [vmem:[%s142 + $0x3a] sm:$0xff] %vm217, %v204
        %224 = vst.msk [vmem:[%s142 + $0x4a] sm:$0xff] %vm217, %v206
        %225 = vst.msk [vmem:[%s142 + $0x52] sm:$0xff] %vm217, %v208
        %s226 = smul.u32 4, %s15
        %p227 = scmp.lt.s32.totalorder %s226, 7
        %s228 = scalar_select %p227, %s226, 7
        %s229 = smul.addr %s228, 3
        %s230 = smul.addr %s229, 8
        %s231 = scalar_lea.vmem %s1, %s230
        // Predicated region
        $region29: #{tpu_custom_call.1} parent=23 // pred_check
          %p232 = pneg %p59
        $region30: #{tpu_custom_call.1} parent=23 // pred_check_branch
          %234 = sbr.rel (%p232) target = $region32
        $region31: #{tpu_custom_call.1} parent=23 // pred_region
          %s235 = smul.u32 4, %s15
        $region32: #{tpu_custom_call.1} parent=23 // pred_fallthru
          _
      $region24: #{tpu_custom_call.1} parent=5 // pred_fallthru
        _
      %p236 = scmp.le.s32.totalorder 2, %s10
      // Predicated region
      $region33: #{tpu_custom_call.1} parent=5 // pred_check
        %p237 = pneg %p236
      $region34: #{tpu_custom_call.1} parent=5 // pred_check_branch
        %239 = sbr.rel (%p237) target = $region36
      $region35: #{tpu_custom_call.1} parent=5 // pred_region
        %s240 = ssub.s32 %s10, 2
        // Predicated region
        $region37: #{tpu_custom_call.1} parent=35 // pred_check
          %p241 = pneg %p65
        $region38: #{tpu_custom_call.1} parent=35 // pred_check_branch
          %243 = sbr.rel (%p241) target = $region40
        $region39: #{tpu_custom_call.1} parent=35 // pred_region
          %s244 = smul.u32 4, %s16
          %p245 = scmp.lt.s32.totalorder %s244, 7
          %s246 = scalar_select %p245, %s244, 7
          %s247 = smul.addr %s246, 3
          %s248 = smul.addr %s247, 8
          %s249 = scalar_lea.vmem %s1, %s248
        $region40: #{tpu_custom_call.1} parent=35 // pred_fallthru
          _
      $region36: #{tpu_custom_call.1} parent=5 // pred_fallthru
        _
    $region6: #{tpu_custom_call.1} parent=1 // loop_footer
      %s14 = sadd.s32 1, %s10
    $region7: #{tpu_custom_call.1} parent=1 // loop_footer_branch
      %9 = sbr.rel target = $region3
    $region8: #{tpu_custom_call.1} parent=1 // loop_exit
      _
    %250 = vsyncpa [#allocation3], 1
    %s251 = scalar_lea.sflag [#allocation3], 1
    %252 = vsyncpa %s251, 1

</llo_original>
